<compile_context>
chip_gen: v6e
topology: v6e:2x2x1
jax: 0.10.0
libtpu: 0.0.40
codegen_flags: <defaults>
</compile_context>

<pallas_src>
import numpy as np
import jax
import jax.numpy as jnp
from jax.experimental import pallas as pl
from jax.experimental.pallas import tpu as pltpu

SCALE = 4          # Encoder(scale=4)
NUM_LAYERS = 2     # num_layers (encoder_layer == identity, see TODO above)
D_MODEL = 64       # d_model1 from the spec
INPUT_DIM = 12     # input_dim (only consumed by the unspecified encoder_layer)


def _interp_matrices(L, scale):
    """Stack of matrices A_s (shape (scale*L, L)) such that A_s @ x equals
    F.interpolate(x[L - L//s:], size=L, mode='linear', align_corners=False)."""
    assert L // scale >= 1, "need L >= scale so every slice is non-empty"
    mats = []
    for s in range(1, scale + 1):
        Ls = L // s
        start = L - Ls
        if Ls == L:
            A = np.eye(L, dtype=np.float32)
        else:
            A = np.zeros((L, L), np.float32)
            j = np.arange(L)
            # PyTorch upsample_linear1d, align_corners=False source index.
            src = np.maximum((j + 0.5) * (Ls / L) - 0.5, 0.0)
            i0 = np.floor(src).astype(np.int64)
            i1 = np.minimum(i0 + 1, Ls - 1)
            lam = (src - i0).astype(np.float32)
            A[j, start + i0] += (1.0 - lam)
            A[j, start + i1] += lam
        mats.append(A)
    return np.concatenate(mats, axis=0)          # (scale*L, L)


def encoder_kernel(x_ref, a_ref, w_ref, o_ref):
    """One batch element of the Encoder forward.

    x_ref : (L, D)        activations for this batch element (batch dim squeezed)
    a_ref : (SCALE*L, L)  stacked slice + linear-interpolation matrices
    w_ref : (D, 1)        AttentionLayer score weight (Linear(D->1, no bias))
    o_ref : (L, D)
    """
    L, D = o_ref.shape
    x = x_ref[...]

    # All SCALE upsampled branches in one MXU matmul.
    up = jnp.dot(a_ref[...], x, preferred_element_type=jnp.float32)       # (S*L, D)

    # Attention scores for every (scale, position) in one matmul.
    sc = jnp.dot(up, w_ref[...], preferred_element_type=jnp.float32)      # (S*L, 1)

    # Vectorized softmax over the scale axis (leading-dim reshape is free).
    sc = sc.reshape(SCALE, L, 1)
    m = jnp.max(sc, axis=0, keepdims=True)                                # (1, L, 1)
    e = jnp.exp(sc - m)                                                   # (S, L, 1)
    inv = 1.0 / jnp.sum(e, axis=0)                                        # (L, 1)

    # Weighted sum over scales: one VPU multiply + sum(axis=0), then normalize.
    ups = up.reshape(SCALE, L, D)
    acc = jnp.sum(ups * e, axis=0)                                        # (L, D)
    o_ref[...] = (acc * inv).astype(o_ref.dtype)


def encoder_forward(x, w_attn, x123=None, *, scale=SCALE, num_layers=NUM_LAYERS):
    """Mirrors Encoder.forward(x, x123) with encoder_layer == identity."""
    del x123, num_layers  # identity encoder layers -> x123 never used
    B, L, D = x.shape
    assert L >= scale, "need L >= scale"

    A = jnp.asarray(_interp_matrices(L, scale))                           # (S*L, L)
    w_col = w_attn.reshape(D, 1).astype(jnp.float32)                      # (D, 1)

    # Whole-call accounting (all B batch elements).
    flops = 2 * B * (scale * L * L * D      # interp matmul
                     + scale * L * D)       # score matmul
    cost = pl.CostEstimate(
        flops=int(flops),
        transcendentals=int(B * scale * L),
        bytes_accessed=int(4 * (2 * B * L * D + scale * L * L + D)),
    )

    grid_spec = pltpu.PrefetchScalarGridSpec(
        num_scalar_prefetch=0,
        grid=(B,),                                            # >= 2 steps feeds both v7x TCs
        in_specs=[
            pl.BlockSpec((None, L, D), lambda b: (b, 0, 0)),  # per-batch block, no transpose
            pl.BlockSpec((scale * L, L), lambda b: (0, 0)),   # interp matrices (const)
            pl.BlockSpec((D, 1), lambda b: (0, 0)),           # attention weight (const)
        ],
        out_specs=pl.BlockSpec((None, L, D), lambda b: (b, 0, 0)),
    )
    return pl.pallas_call(
        encoder_kernel,
        out_shape=jax.ShapeDtypeStruct((B, L, D), jnp.float32),
        grid_spec=grid_spec,
        compiler_params=pltpu.CompilerParams(
            dimension_semantics=("parallel",)),               # batch elements independent
        cost_estimate=cost,
    )(x.astype(jnp.float32), A, w_col)


def encoder_ref(x, w_attn, scale=SCALE):
    """Pure-JAX mirror of Encoder.forward (encoder_layer = identity)."""
    B, L, D = x.shape
    outs = []
    for s in range(1, scale + 1):
        Ls = L // s
        xi = x[:, L - Ls:, :]
        if Ls < L:
            j = np.arange(L)
            src = np.maximum((j + 0.5) * (Ls / L) - 0.5, 0.0)
            i0 = np.floor(src).astype(np.int32)
            i1 = np.minimum(i0 + 1, Ls - 1)
            lam = jnp.asarray((src - i0).astype(np.float32))
            xi = (xi[:, i0, :] * (1.0 - lam)[None, :, None]
                  + xi[:, i1, :] * lam[None, :, None])
        outs.append(xi)                                     # encoder layers: identity
    merged = jnp.stack(outs, axis=1)                        # (B, scale, L, D)
    scores = jnp.einsum('bsld,d->bsl', merged, w_attn)[..., None]
    weights = jax.nn.softmax(scores, axis=1)
    return jnp.sum(merged * weights, axis=1)                # (B, L, D)


if __name__ == "__main__":
    B, L, D = 2, 16, D_MODEL                                # batch=2, seq=16, d_model1=64
    key = jax.random.PRNGKey(0)
    kx, kw, k123 = jax.random.split(key, 3)
    x = jax.random.normal(kx, (B, L, D), jnp.float32)
    w_attn = jax.random.normal(kw, (D,), jnp.float32) * 0.1     # AttentionLayer weight
    x123 = jax.random.normal(k123, (B, L, INPUT_DIM), jnp.float32)  # unused (identity layers)

    out = encoder_forward(x, w_attn, x123)
    out = jax.block_until_ready(out)

    ref = encoder_ref(x, w_attn)
    assert out.shape == (B, L, D), out.shape
    err = float(jnp.max(jnp.abs(out - ref)))
    assert jnp.allclose(out, ref, atol=1e-4, rtol=1e-4), err
    print("KERNEL_OK")
</pallas_src>

<mosaic_0001>
module attributes {stable_mosaic.version = 11 : i64} {
  func.func @encoder_kernel(%arg0: i32, %arg1: memref<1x16x64xf32, #tpu.memory_space<vmem>>, %arg2: memref<64x16xf32, #tpu.memory_space<vmem>>, %arg3: memref<64x1xf32, #tpu.memory_space<vmem>>, %arg4: memref<1x16x64xf32, #tpu.memory_space<vmem>>) attributes {dimension_semantics = [#tpu.dimension_semantics<parallel>], iteration_bounds = array<i64: 2>, scalar_prefetch = 0 : i64, scratch_operands = 0 : i64, tpu.core_type = #tpu.core_type<tc>, window_params = [{transform_indices = @transform_0, window_bounds = array<i64: 1, 16, 64>}, {pipeline_mode = #tpu.pipeline_mode<synchronous>, transform_indices = @transform_1, window_bounds = array<i64: 64, 16>}, {pipeline_mode = #tpu.pipeline_mode<synchronous>, transform_indices = @transform_2, window_bounds = array<i64: 64, 1>}, {transform_indices = @transform_3, window_bounds = array<i64: 1, 16, 64>}]} {
    %c0 = arith.constant 0 : index
    %c0_0 = arith.constant 0 : index
    %c0_1 = arith.constant 0 : index
    %0 = vector.load %arg1[%c0, %c0_0, %c0_1] : memref<1x16x64xf32, #tpu.memory_space<vmem>>, vector<1x16x64xf32>
    %1 = vector.shape_cast %0 : vector<1x16x64xf32> to vector<16x64xf32>
    %c0_2 = arith.constant 0 : index
    %c0_3 = arith.constant 0 : index
    %2 = vector.load %arg2[%c0_2, %c0_3] : memref<64x16xf32, #tpu.memory_space<vmem>>, vector<64x16xf32>
    %cst = arith.constant dense<0.000000e+00> : vector<64x64xf32>
    %3 = tpu.matmul %2, %1, %cst {dimension_numbers = #tpu.dot_dimension_numbers<[1], [0], [0], [1], [0, 0, 1, 1], [], []>} : vector<64x16xf32>, vector<16x64xf32>, vector<64x64xf32> -> vector<64x64xf32>
    %c0_4 = arith.constant 0 : index
    %c0_5 = arith.constant 0 : index
    %4 = vector.load %arg3[%c0_4, %c0_5] : memref<64x1xf32, #tpu.memory_space<vmem>>, vector<64x1xf32>
    %cst_6 = arith.constant dense<0.000000e+00> : vector<64x1xf32>
    %5 = tpu.matmul %3, %4, %cst_6 {dimension_numbers = #tpu.dot_dimension_numbers<[1], [0], [0], [1], [0, 0, 1, 1], [], []>} : vector<64x64xf32>, vector<64x1xf32>, vector<64x1xf32> -> vector<64x1xf32>
    %6 = vector.shape_cast %5 : vector<64x1xf32> to vector<4x16x1xf32>
    %cst_7 = arith.constant dense<0xFF800000> : vector<16x1xf32>
    %7 = vector.multi_reduction <maximumf>, %6, %cst_7 [0] : vector<4x16x1xf32> to vector<16x1xf32>
    %8 = vector.shape_cast %7 : vector<16x1xf32> to vector<1x16x1xf32>
    %9 = vector.broadcast %8 : vector<1x16x1xf32> to vector<4x16x1xf32>
    %10 = arith.subf %6, %9 : vector<4x16x1xf32>
    %11 = math.exp %10 : vector<4x16x1xf32>
    %cst_8 = arith.constant dense<0.000000e+00> : vector<16x1xf32>
    %12 = vector.multi_reduction <add>, %11, %cst_8 [0] : vector<4x16x1xf32> to vector<16x1xf32>
    %cst_9 = arith.constant 1.000000e+00 : f32
    %13 = vector.broadcast %cst_9 : f32 to vector<16x1xf32>
    %14 = arith.divf %13, %12 : vector<16x1xf32>
    %15 = vector.shape_cast %3 : vector<64x64xf32> to vector<4x16x64xf32>
    %16 = vector.broadcast %11 : vector<4x16x1xf32> to vector<4x16x64xf32>
    %17 = arith.mulf %15, %16 : vector<4x16x64xf32>
    %cst_10 = arith.constant dense<0.000000e+00> : vector<16x64xf32>
    %18 = vector.multi_reduction <add>, %17, %cst_10 [0] : vector<4x16x64xf32> to vector<16x64xf32>
    %19 = vector.broadcast %14 : vector<16x1xf32> to vector<16x64xf32>
    %20 = arith.mulf %18, %19 : vector<16x64xf32>
    %c0_11 = arith.constant 0 : index
    %c0_12 = arith.constant 0 : index
    %c0_13 = arith.constant 0 : index
    %21 = vector.load %arg4[%c0_11, %c0_12, %c0_13] : memref<1x16x64xf32, #tpu.memory_space<vmem>>, vector<1x16x64xf32>
    %22 = vector.shape_cast %21 : vector<1x16x64xf32> to vector<16x64xf32>
    %23 = vector.shape_cast %20 : vector<16x64xf32> to vector<1x16x64xf32>
    tpu.vector_store %arg4[%c0_11, %c0_12, %c0_13], %23 {strides = array<i32>} : memref<1x16x64xf32, #tpu.memory_space<vmem>>, vector<1x16x64xf32>,
    return
  }
  func.func @transform_0(%arg0: i32) -> (i32, i32, i32) {
    %c0_i32 = arith.constant 0 : i32
    %c0_i32_0 = arith.constant 0 : i32
    %c0_i32_1 = arith.constant 0 : i32
    return %arg0, %c0_i32, %c0_i32_0 : i32, i32, i32
  }
  func.func @transform_1(%arg0: i32) -> (i32, i32) {
    %c0_i32 = arith.constant 0 : i32
    %c0_i32_0 = arith.constant 0 : i32
    %c0_i32_1 = arith.constant 0 : i32
    return %c0_i32, %c0_i32_0 : i32, i32
  }
  func.func @transform_2(%arg0: i32) -> (i32, i32) {
    %c0_i32 = arith.constant 0 : i32
    %c0_i32_0 = arith.constant 0 : i32
    %c0_i32_1 = arith.constant 0 : i32
    return %c0_i32, %c0_i32_0 : i32, i32
  }
  func.func @transform_3(%arg0: i32) -> (i32, i32, i32) {
    %c0_i32 = arith.constant 0 : i32
    %c0_i32_0 = arith.constant 0 : i32
    %c0_i32_1 = arith.constant 0 : i32
    return %arg0, %c0_i32, %c0_i32_0 : i32, i32, i32
  }
}

</mosaic_0001>

<llo_original>
// kernel: tpu_custom_call.1
$region0: #{tpu_custom_call.1}
  #allocation0 [shape = 'u32[]', space=smem, size = 0x4, offset = 0x4, fixed_abs, tag = 'smem constant byte address 0x4 - core index']
  #allocation1 [shape = 'u32[144,128]{1,0:T(1,128)}', space=vmem, size = 0x12000, scoped, tag = 'internal scratch']
  %s0 = inlined_call_operand.vmem [shape: f32[2,16,64], index: 0, kind: input, shape index: {}]
  %s1 = inlined_call_operand.vmem [shape: f32[64,16], index: 1, kind: input, shape index: {}]
  %s2 = inlined_call_operand.vmem [shape: f32[64,1], index: 2, kind: input, shape index: {}]
  %s3 = inlined_call_operand.hbm [shape: f32[2,16,64], index: 3, kind: output, shape index: {}]
  %s4 = sld [smem:[#allocation0]]
  $region45: #{tpu_custom_call.1} parent=0
    _
  %s6 = ssub.s32 1, %s4
  %s7 = scalar_select 0, %s6, %s4
  $region1: #{tpu_custom_call.1} parent=0
    #allocation2 [shape = 'u8[16384]{0}', space=vmem, size = 0x4000, scoped, tag = 'output window, operand 0']
    #allocation3 [shape = 's32[2]{0}', space=sflag, size = 0x8, scoped, tag = 'scoped memory for tpu_custom_call.1']
    %8 = vsyncpa [#allocation3], 0
    %s9 = scalar_lea.sflag [#allocation3], 1
    %10 = vsyncpa %s9, 0
    loop: start=0, step=1, limit=4
    $region2: #{tpu_custom_call.1} parent=1 // loop_pre_header
      _
    $region3: #{tpu_custom_call.1} parent=1 // loop_header
      %s12 = sphi 0, %s16
      %p13 = scmp.ge.s32.totalorder %s12, 4
      %s22 = sphi 0, %s24
      %s25 = sphi 0, %s22
      %s26 = sphi 0, %s25
      %s42 = sphi 0, %s26
      %s46 = sphi 0, %s46
      %s48 = sphi 0, %s46
      %s49 = sphi 0, %s48
      %s63 = sphi 0, %s49
      %s67 = sphi 0, %s67
      %s69 = sphi 0, %s67
      %s70 = sphi 0, %s69
      %s84 = sphi 0, %s70
      %s90 = sphi 0, %s92
      %s93 = sphi 0, %s90
      %s94 = sphi 0, %s93
      %s110 = sphi 0, %s94
    $region4: #{tpu_custom_call.1} parent=1 // loop_header_branch
      %15 = sbr.rel (%p13) target = $region8
    $region5: #{tpu_custom_call.1} parent=1 // loop_body
      %s17 = ssub.s32 %s12, 1
      %s18 = ssub.s32 %s12, 2
      %s19 = sadd.s32 %s12, 1
      %s20 = ssub.s32 %s12, %s19
      %p21 = scmp.eq.s32.totalorder %s20, 0
      %s23 = sadd.s32 %s22, 1
      %s24 = scalar_select %p21, %s22, %s23
      %p27 = pneg %p21
      %p28 = scmp.eq.s32.totalorder %s12, 1
      %p29 = por %p27, %p28
      %p30 = scmp.ne.s32.totalorder %s22, %s25
      %p31 = scmp.eq.s32.totalorder %s12, 0
      %p32 = por %p30, %p31
      %p33 = scmp.ne.s32.totalorder %s22, %s25
      %p34 = scmp.eq.s32.totalorder %s17, 1
      %p35 = por %p33, %p34
      %p36 = scmp.ne.s32.totalorder %s25, %s26
      %p37 = scmp.eq.s32.totalorder %s17, 0
      %p38 = por %p36, %p37
      %p39 = scmp.ne.s32.totalorder %s25, %s26
      %p40 = scmp.eq.s32.totalorder %s18, 1
      %p41 = por %p39, %p40
      %p43 = scmp.ne.s32.totalorder %s26, %s42
      %p44 = scmp.eq.s32.totalorder %s18, 0
      %p45 = por %p43, %p44
      %s47 = sadd.s32 %s46, 1
      %p50 = scmp.eq.s32.totalorder %s12, 1
      %p51 = scmp.ne.s32.totalorder %s46, %s48
      %p52 = scmp.eq.s32.totalorder %s12, 0
      %p53 = por %p51, %p52
      %p54 = scmp.ne.s32.totalorder %s46, %s48
      %p55 = scmp.eq.s32.totalorder %s17, 1
      %p56 = por %p54, %p55
      %p57 = scmp.ne.s32.totalorder %s48, %s49
      %p58 = scmp.eq.s32.totalorder %s17, 0
      %p59 = por %p57, %p58
      %p60 = scmp.ne.s32.totalorder %s48, %s49
      %p61 = scmp.eq.s32.totalorder %s18, 1
      %p62 = por %p60, %p61
      %p64 = scmp.ne.s32.totalorder %s49, %s63
      %p65 = scmp.eq.s32.totalorder %s18, 0
      %p66 = por %p64, %p65
      %s68 = sadd.s32 %s67, 1
      %p71 = scmp.eq.s32.totalorder %s12, 1
      %p72 = scmp.ne.s32.totalorder %s67, %s69
      %p73 = scmp.eq.s32.totalorder %s12, 0
      %p74 = por %p72, %p73
      %p75 = scmp.ne.s32.totalorder %s67, %s69
      %p76 = scmp.eq.s32.totalorder %s17, 1
      %p77 = por %p75, %p76
      %p78 = scmp.ne.s32.totalorder %s69, %s70
      %p79 = scmp.eq.s32.totalorder %s17, 0
      %p80 = por %p78, %p79
      %p81 = scmp.ne.s32.totalorder %s69, %s70
      %p82 = scmp.eq.s32.totalorder %s18, 1
      %p83 = por %p81, %p82
      %p85 = scmp.ne.s32.totalorder %s70, %s84
      %p86 = scmp.eq.s32.totalorder %s18, 0
      %p87 = por %p85, %p86
      %s88 = ssub.s32 %s12, %s19
      %p89 = scmp.eq.s32.totalorder %s88, 0
      %s91 = sadd.s32 %s90, 1
      %s92 = scalar_select %p89, %s90, %s91
      %p95 = pneg %p89
      %p96 = scmp.eq.s32.totalorder %s12, 1
      %p97 = por %p95, %p96
      %p98 = scmp.ne.s32.totalorder %s90, %s93
      %p99 = scmp.eq.s32.totalorder %s12, 0
      %p100 = por %p98, %p99
      %p101 = scmp.ne.s32.totalorder %s90, %s93
      %p102 = scmp.eq.s32.totalorder %s17, 1
      %p103 = por %p101, %p102
      %p104 = scmp.ne.s32.totalorder %s93, %s94
      %p105 = scmp.eq.s32.totalorder %s17, 0
      %p106 = por %p104, %p105
      %p107 = scmp.ne.s32.totalorder %s93, %s94
      %p108 = scmp.eq.s32.totalorder %s18, 1
      %p109 = por %p107, %p108
      %p111 = scmp.ne.s32.totalorder %s94, %s110
      %p112 = scmp.eq.s32.totalorder %s18, 0
      %p113 = por %p111, %p112
      %p114 = scmp.le.s32.totalorder 1, %s12
      %p115 = scmp.lt.s32.totalorder %s12, 3
      %p116 = pnand %p114, %p115
      %p117 = pneg %p116
      // Predicated region
      $region9: #{tpu_custom_call.1} parent=5 // pred_check
        _
      $region10: #{tpu_custom_call.1} parent=5 // pred_check_branch
        %119 = sbr.rel (%p116) target = $region12
      $region11: #{tpu_custom_call.1} parent=5 // pred_region
        %s120 = ssub.s32 %s12, 1
        // Predicated region
        $region13: #{tpu_custom_call.1} parent=11 // pred_check
          %p121 = pneg %p59
        $region14: #{tpu_custom_call.1} parent=11 // pred_check_branch
          %123 = sbr.rel (%p121) target = $region16
        $region15: #{tpu_custom_call.1} parent=11 // pred_region
          _
        $region16: #{tpu_custom_call.1} parent=11 // pred_fallthru
          _
        // Predicated region
        $region17: #{tpu_custom_call.1} parent=11 // pred_check
          %p124 = pneg %p80
        $region18: #{tpu_custom_call.1} parent=11 // pred_check_branch
          %126 = sbr.rel (%p124) target = $region20
        $region19: #{tpu_custom_call.1} parent=11 // pred_region
          _
        $region20: #{tpu_custom_call.1} parent=11 // pred_fallthru
          _
      $region12: #{tpu_custom_call.1} parent=5 // pred_fallthru
        _
      %p127 = scmp.lt.s32.totalorder %s12, 2
      // Predicated region
      $region21: #{tpu_custom_call.1} parent=5 // pred_check
        %p128 = pneg %p127
      $region22: #{tpu_custom_call.1} parent=5 // pred_check_branch
        %130 = sbr.rel (%p128) target = $region24
      $region23: #{tpu_custom_call.1} parent=5 // pred_region
        // Predicated region
        $region25: #{tpu_custom_call.1} parent=23 // pred_check
          %p131 = pneg %p32
        $region26: #{tpu_custom_call.1} parent=23 // pred_check_branch
          %133 = sbr.rel (%p131) target = $region28
        $region27: #{tpu_custom_call.1} parent=23 // pred_region
          %p134 = scmp.lt.s32.totalorder %s12, 1
          %s135 = scalar_select %p134, %s12, 1
          %s136 = smul.addr %s135, 2
          %s137 = smul.addr %s136, 8
          %s138 = scalar_lea.vmem %s0, %s137
        $region28: #{tpu_custom_call.1} parent=23 // pred_fallthru
          _
      $region24: #{tpu_custom_call.1} parent=5 // pred_fallthru
        _
      %p139 = scmp.le.s32.totalorder 1, %s12
      %p140 = scmp.lt.s32.totalorder %s12, 3
      %p141 = pnand %p139, %p140
      %p142 = pneg %p141
      // Predicated region
      $region29: #{tpu_custom_call.1} parent=5 // pred_check
        _
      $region30: #{tpu_custom_call.1} parent=5 // pred_check_branch
        %144 = sbr.rel (%p141) target = $region32
      $region31: #{tpu_custom_call.1} parent=5 // pred_region
        %s145 = ssub.s32 %s12, 1
        %p146 = scmp.lt.s32.totalorder %s17, 1
        %s147 = scalar_select %p146, %s17, 1
        %s148 = smul.addr %s147, 2
        %s149 = smul.addr %s148, 8
        %s150 = scalar_lea.vmem %s0, %s149
        %p151 = pneg %p38
        %p152 = pneg %p35
        %p153 = pneg %p59
        %p154 = pneg %p56
        %p155 = pneg %p80
        %p156 = pneg %p77
        %p157 = pneg %p106
        %p158 = pneg %p103
        %s159 = sand.u32 %s93, 1
        %s160 = scalar_lea.sflag [#allocation3], %s159
        %s161 = sand.u32 %s93, 1
        %s162 = smul.addr %s161, 16
        %s163 = scalar_lea.vmem [#allocation2], %s162
        %p164 = scmp.lt.s32.totalorder %s17, 1
        %s165 = scalar_select %p164, %s17, 1
        %s166 = smul.addr %s165, 2
        %s167 = smul.addr %s166, 8
        %s168 = scalar_lea.vmem %s0, %s167
        %v169 = vld [vmem:[%s168] sm:$0xff]
        %v170 = vld [vmem:[%s168 + $0x8] sm:$0xff]
        %v171 = vld [vmem:[%s1] sm:$0xff]
        %v172 = vld [vmem:[%s1 + $0x8] sm:$0xff]
        %v173 = vld [vmem:[%s1 + $0x10] sm:$0xff]
        %v174 = vld [vmem:[%s1 + $0x18] sm:$0xff]
        %v175 = vld [vmem:[%s1 + $0x20] sm:$0xff]
        %v176 = vld [vmem:[%s1 + $0x28] sm:$0xff]
        %v177 = vld [vmem:[%s1 + $0x30] sm:$0xff]
        %v178 = vld [vmem:[%s1 + $0x38] sm:$0xff]
        %vm179 = vcmask 130048
        %v181 = vsel %vm179, %v171, 0
        %v184 = vsel %vm179, %v172, 0
        %v187 = vsel %vm179, %v173, 0
        %v190 = vsel %vm179, %v174, 0
        %v193 = vsel %vm179, %v175, 0
        %v196 = vsel %vm179, %v176, 0
        %v199 = vsel %vm179, %v177, 0
        %v202 = vsel %vm179, %v178, 0
        %204 = vmatprep.subr.mxu0 0.0
        %205 = vmatpush1.msra.mxu0 0.0
        %206 = vmatprep.subr.mxu0 0.0
        %207 = vmatpush1.msra.mxu0 0.0
        %208 = vmatprep.subr.mxu0 0.0
        %209 = vmatpush1.msra.mxu0 0.0
        %210 = vmatprep.subr.mxu0 0.0
        %211 = vmatpush1.msra.mxu0 0.0
        %212 = vmatprep.subr.mxu0 0.0
        %213 = vmatpush1.msra.mxu0 0.0
        %214 = vmatprep.subr.mxu0 0.0
        %215 = vmatpush1.msra.mxu0 0.0
        %216 = vmatprep.subr.mxu0 0.0
        %217 = vmatpush1.msra.mxu0 0.0
        %218 = vmatprep.subr.mxu0 0.0
        %219 = vmatpush1.msra.mxu0 0.0
        %220 = vmatprep.subr.mxu0 0.0
        %221 = vmatpush1.msra.mxu0 0.0
        %222 = vmatprep.subr.mxu0 0.0
        %223 = vmatpush1.msra.mxu0 0.0
        %224 = vmatprep.subr.mxu0 0.0
        %225 = vmatpush1.msra.mxu0 0.0
        %226 = vmatprep.subr.mxu0 0.0
        %227 = vmatpush1.msra.mxu0 0.0
        %228 = vmatprep.subr.mxu0 0.0
        %229 = vmatpush1.msra.mxu0 0.0
        %230 = vmatprep.subr.mxu0 0.0
        %231 = vmatpush1.msra.mxu0 0.0
        %232 = vmatprep.subr.mxu0 0.0
        %233 = vmatpush1.msra.mxu0 %v170
        %234 = vmatprep.subr.mxu0 0.0
        %235 = vmatpush1.msra.mxu0 %v169
        %236 = vmatprep.subr.mxu0 0.0
        %237 = vmatpush2.msra.mxu0 0.0
        %238 = vmatprep.subr.mxu0 0.0
        %239 = vmatpush2.msra.mxu0 0.0
        %240 = vmatprep.subr.mxu0 0.0
        %241 = vmatpush2.msra.mxu0 0.0
        %242 = vmatprep.subr.mxu0 0.0
        %243 = vmatpush2.msra.mxu0 0.0
        %244 = vmatprep.subr.mxu0 0.0
        %245 = vmatpush2.msra.mxu0 0.0
        %246 = vmatprep.subr.mxu0 0.0
        %247 = vmatpush2.msra.mxu0 0.0
        %248 = vmatprep.subr.mxu0 0.0
        %249 = vmatpush2.msra.mxu0 0.0
        %250 = vmatprep.subr.mxu0 0.0
        %251 = vmatpush2.msra.mxu0 0.0
        %252 = vmatprep.subr.mxu0 0.0
        %253 = vmatpush2.msra.mxu0 0.0
        %254 = vmatprep.subr.mxu0 0.0
        %255 = vmatpush2.msra.mxu0 0.0
        %256 = vmatprep.subr.mxu0 0.0
        %257 = vmatpush2.msra.mxu0 0.0
        %258 = vmatprep.subr.mxu0 0.0
        %259 = vmatpush2.msra.mxu0 0.0
        %260 = vmatprep.subr.mxu0 0.0
        %261 = vmatpush2.msra.mxu0 0.0
        %262 = vmatprep.subr.mxu0 0.0
        %263 = vmatpush2.msra.mxu0 0.0
        %264 = vmatprep.subr.mxu0 0.0
        %265 = vmatpush2.msra.mxu0 0.0
        %266 = vmatprep.subr.mxu0 0.0
        %267 = vmatpush2.msra.mxu0 0.0
        %268 = vmatprep.mubr.f32.mxu0 0.0
        %269 = vmatmul.mubr.f32.gmra.mxu0 %v181
        %v270 = vpop.f32.mrf.mxu0
        %v271 = vadd.f32 0.0, %v270
        %v272 = vpop.f32.mrf.mxu0
        %273 = vmatprep.mubr.f32.mxu0 0.0
        %274 = vmatmul.mubr.f32.gmra.mxu0 %v184
        %v275 = vpop.f32.mrf.mxu0
        %v276 = vadd.f32 0.0, %v275
        %v277 = vpop.f32.mrf.mxu0
        %278 = vmatprep.mubr.f32.mxu0 0.0
        %279 = vmatmul.mubr.f32.gmra.mxu0 %v187
        %v280 = vpop.f32.mrf.mxu0
        %v281 = vadd.f32 0.0, %v280
        %v282 = vpop.f32.mrf.mxu0
        %283 = vmatprep.mubr.f32.mxu0 0.0
        %284 = vmatmul.mubr.f32.gmra.mxu0 %v190
        %v285 = vpop.f32.mrf.mxu0
        %v286 = vadd.f32 0.0, %v285
        %v287 = vpop.f32.mrf.mxu0
        %288 = vmatprep.mubr.f32.mxu0 0.0
        %289 = vmatmul.mubr.f32.gmra.mxu0 %v193
        %v290 = vpop.f32.mrf.mxu0
        %v291 = vadd.f32 0.0, %v290
        %v292 = vpop.f32.mrf.mxu0
        %293 = vmatprep.mubr.f32.mxu0 0.0
        %294 = vmatmul.mubr.f32.gmra.mxu0 %v196
        %v295 = vpop.f32.mrf.mxu0
        %v296 = vadd.f32 0.0, %v295
        %v297 = vpop.f32.mrf.mxu0
        %298 = vmatprep.mubr.f32.mxu0 0.0
        %299 = vmatmul.mubr.f32.gmra.mxu0 %v199
        %v300 = vpop.f32.mrf.mxu0
        %v301 = vadd.f32 0.0, %v300
        %v302 = vpop.f32.mrf.mxu0
        %303 = vmatprep.mubr.f32.mxu0 0.0
        %304 = vmatmul.mubr.f32.gmra.mxu0 %v202
        %v305 = vpop.f32.mrf.mxu0
        %v306 = vadd.f32 0.0, %v305
        %v307 = vpop.f32.mrf.mxu0
        %308 = vdwg.mxu0
        %v309 = vld [vmem:[%s2] sm:$0xff]
        %v310 = vld [vmem:[%s2 + $0x8] sm:$0xff]
        %v311 = vld [vmem:[%s2 + $0x10] sm:$0xff]
        %v312 = vld [vmem:[%s2 + $0x18] sm:$0xff]
        %v313 = vld [vmem:[%s2 + $0x20] sm:$0xff]
        %v314 = vld [vmem:[%s2 + $0x28] sm:$0xff]
        %v315 = vld [vmem:[%s2 + $0x30] sm:$0xff]
        %v316 = vld [vmem:[%s2 + $0x38] sm:$0xff]
        %vm317 = vcmask 523264
        %v319 = vsel %vm317, %v271, 0
        %v322 = vsel %vm317, %v276, 0
        %v325 = vsel %vm317, %v281, 0
        %v328 = vsel %vm317, %v286, 0
        %v331 = vsel %vm317, %v291, 0
        %v334 = vsel %vm317, %v296, 0
        %v337 = vsel %vm317, %v301, 0
        %v340 = vsel %vm317, %v306, 0
        %342 = vmatprep.subr.mxu0 0.0
        %343 = vmatpush1.msra.mxu0 0.0
        %344 = vmatprep.subr.mxu0 0.0
        %345 = vmatpush1.msra.mxu0 0.0
        %346 = vmatprep.subr.mxu0 0.0
        %347 = vmatpush1.msra.mxu0 0.0
        %348 = vmatprep.subr.mxu0 0.0
        %349 = vmatpush1.msra.mxu0 0.0
        %350 = vmatprep.subr.mxu0 0.0
        %351 = vmatpush1.msra.mxu0 0.0
        %352 = vmatprep.subr.mxu0 0.0
        %353 = vmatpush1.msra.mxu0 0.0
        %354 = vmatprep.subr.mxu0 0.0
        %355 = vmatpush1.msra.mxu0 0.0
        %356 = vmatprep.subr.mxu0 0.0
        %357 = vmatpush1.msra.mxu0 0.0
        %358 = vmatprep.subr.mxu0 0.0
        %359 = vmatpush1.msra.mxu0 %v316
        %360 = vmatprep.subr.mxu0 0.0
        %361 = vmatpush1.msra.mxu0 %v315
        %362 = vmatprep.subr.mxu0 0.0
        %363 = vmatpush1.msra.mxu0 %v314
        %364 = vmatprep.subr.mxu0 0.0
        %365 = vmatpush1.msra.mxu0 %v313
        %366 = vmatprep.subr.mxu0 0.0
        %367 = vmatpush1.msra.mxu0 %v312
        %368 = vmatprep.subr.mxu0 0.0
        %369 = vmatpush1.msra.mxu0 %v311
        %370 = vmatprep.subr.mxu0 0.0
        %371 = vmatpush1.msra.mxu0 %v310
        %372 = vmatprep.subr.mxu0 0.0
        %373 = vmatpush1.msra.mxu0 %v309
        %374 = vmatprep.subr.mxu0 0.0
        %375 = vmatpush2.msra.mxu0 0.0
        %376 = vmatprep.subr.mxu0 0.0
        %377 = vmatpush2.msra.mxu0 0.0
        %378 = vmatprep.subr.mxu0 0.0
        %379 = vmatpush2.msra.mxu0 0.0
        %380 = vmatprep.subr.mxu0 0.0
        %381 = vmatpush2.msra.mxu0 0.0
        %382 = vmatprep.subr.mxu0 0.0
        %383 = vmatpush2.msra.mxu0 0.0
        %384 = vmatprep.subr.mxu0 0.0
        %385 = vmatpush2.msra.mxu0 0.0
        %386 = vmatprep.subr.mxu0 0.0
        %387 = vmatpush2.msra.mxu0 0.0
        %388 = vmatprep.subr.mxu0 0.0
        %389 = vmatpush2.msra.mxu0 0.0
        %390 = vmatprep.subr.mxu0 0.0
        %391 = vmatpush2.msra.mxu0 0.0
        %392 = vmatprep.subr.mxu0 0.0
        %393 = vmatpush2.msra.mxu0 0.0
        %394 = vmatprep.subr.mxu0 0.0
        %395 = vmatpush2.msra.mxu0 0.0
        %396 = vmatprep.subr.mxu0 0.0
        %397 = vmatpush2.msra.mxu0 0.0
        %398 = vmatprep.subr.mxu0 0.0
        %399 = vmatpush2.msra.mxu0 0.0
        %400 = vmatprep.subr.mxu0 0.0
        %401 = vmatpush2.msra.mxu0 0.0
        %402 = vmatprep.subr.mxu0 0.0
        %403 = vmatpush2.msra.mxu0 0.0
        %404 = vmatprep.subr.mxu0 0.0
        %405 = vmatpush2.msra.mxu0 0.0
        %406 = vmatprep.mubr.f32.mxu0 0.0
        %407 = vmatmul.mubr.f32.gmra.mxu0 %v319
        %v408 = vpop.f32.mrf.mxu0
        %v409 = vadd.f32 0.0, %v408
        %v410 = vpop.f32.mrf.mxu0
        %411 = vmatprep.mubr.f32.mxu0 0.0
        %412 = vmatmul.mubr.f32.gmra.mxu0 %v322
        %v413 = vpop.f32.mrf.mxu0
        %v414 = vadd.f32 0.0, %v413
        %v415 = vpop.f32.mrf.mxu0
        %416 = vmatprep.mubr.f32.mxu0 0.0
        %417 = vmatmul.mubr.f32.gmra.mxu0 %v325
        %v418 = vpop.f32.mrf.mxu0
        %v419 = vadd.f32 0.0, %v418
        %v420 = vpop.f32.mrf.mxu0
        %421 = vmatprep.mubr.f32.mxu0 0.0
        %422 = vmatmul.mubr.f32.gmra.mxu0 %v328
        %v423 = vpop.f32.mrf.mxu0
        %v424 = vadd.f32 0.0, %v423
        %v425 = vpop.f32.mrf.mxu0
        %426 = vmatprep.mubr.f32.mxu0 0.0
        %427 = vmatmul.mubr.f32.gmra.mxu0 %v331
        %v428 = vpop.f32.mrf.mxu0
        %v429 = vadd.f32 0.0, %v428
        %v430 = vpop.f32.mrf.mxu0
        %431 = vmatprep.mubr.f32.mxu0 0.0
        %432 = vmatmul.mubr.f32.gmra.mxu0 %v334
        %v433 = vpop.f32.mrf.mxu0
        %v434 = vadd.f32 0.0, %v433
        %v435 = vpop.f32.mrf.mxu0
        %436 = vmatprep.mubr.f32.mxu0 0.0
        %437 = vmatmul.mubr.f32.gmra.mxu0 %v337
        %v438 = vpop.f32.mrf.mxu0
        %v439 = vadd.f32 0.0, %v438
        %v440 = vpop.f32.mrf.mxu0
        %441 = vmatprep.mubr.f32.mxu0 0.0
        %442 = vmatmul.mubr.f32.gmra.mxu0 %v340
        %v443 = vpop.f32.mrf.mxu0
        %v444 = vadd.f32 0.0, %v443
        %v445 = vpop.f32.mrf.mxu0
        %446 = vdwg.mxu0
        %vm447 = vcmask 7168
        %v448 = vsel %vm447, %v409, -inf
        %v449 = vsel %vm447, %v419, -inf
        %v450 = vsel %vm447, %v429, -inf
        %v451 = vmax.f32 %v448, %v450
        %v452 = vsel %vm447, %v439, -inf
        %v453 = vmax.f32 %v449, %v452
        %v454 = vmax.f32 %v451, %v453
        %v455 = vsel %vm447, %v414, -inf
        %v456 = vsel %vm447, %v424, -inf
        %v457 = vsel %vm447, %v434, -inf
        %v458 = vmax.f32 %v455, %v457
        %v459 = vsel %vm447, %v444, -inf
        %v460 = vmax.f32 %v456, %v459
        %v461 = vmax.f32 %v458, %v460
        %v462 = vsub.f32 %v409, %v454
        %v463 = vsub.f32 %v414, %v461
        %v464 = vsub.f32 %v419, %v454
        %v465 = vsub.f32 %v424, %v461
        %v466 = vsub.f32 %v429, %v454
        %v467 = vsub.f32 %v434, %v461
        %v468 = vsub.f32 %v439, %v454
        %v469 = vsub.f32 %v444, %v461
        %v470 = vmul.f32 %v462, 1.442695
        %v471 = vpow.pop %v470
        %v472 = vmul.f32 %v463, 1.442695
        %v473 = vpow.pop %v472
        %v474 = vmul.f32 %v464, 1.442695
        %v475 = vpow.pop %v474
        %v476 = vmul.f32 %v465, 1.442695
        %v477 = vpow.pop %v476
        %v478 = vmul.f32 %v466, 1.442695
        %v479 = vpow.pop %v478
        %v480 = vmul.f32 %v467, 1.442695
        %v481 = vpow.pop %v480
        %v482 = vmul.f32 %v468, 1.442695
        %v483 = vpow.pop %v482
        %v484 = vmul.f32 %v469, 1.442695
        %v485 = vpow.pop %v484
        %v486 = vsel %vm447, %v471, 0.0
        %v487 = vsel %vm447, %v475, 0.0
        %v488 = vadd.f32 %v486, %v487
        %v489 = vsel %vm447, %v479, 0.0
        %v490 = vadd.f32 %v488, %v489
        %v491 = vsel %vm447, %v483, 0.0
        %v492 = vadd.f32 %v490, %v491
        %v493 = vsel %vm447, %v473, 0.0
        %v494 = vsel %vm447, %v477, 0.0
        %v495 = vadd.f32 %v493, %v494
        %v496 = vsel %vm447, %v481, 0.0
        %v497 = vadd.f32 %v495, %v496
        %v498 = vsel %vm447, %v485, 0.0
        %v499 = vadd.f32 %v497, %v498
        %v500 = vrcp.pop %v492
        %v501 = vmul.f32 1.0, %v500
        %v502 = vrcp.pop %v499
        %v503 = vmul.f32 1.0, %v502
        %505 = vset.pattern.permute.xlu0 0
        %506 = vperm.xlu0 %505, %v471
        %v507 = vpop.permute.xlu0 %506
        %510 = vset.pattern.permute.xlu0 0
        %511 = vperm.xlu0 %510, %v473
        %v512 = vpop.permute.xlu0 %511
        %515 = vset.pattern.permute.xlu0 0
        %516 = vperm.xlu0 %515, %v475
        %v517 = vpop.permute.xlu0 %516
        %520 = vset.pattern.permute.xlu0 0
        %521 = vperm.xlu0 %520, %v477
        %v522 = vpop.permute.xlu0 %521
        %525 = vset.pattern.permute.xlu0 0
        %526 = vperm.xlu0 %525, %v479
        %v527 = vpop.permute.xlu0 %526
        %530 = vset.pattern.permute.xlu0 0
        %531 = vperm.xlu0 %530, %v481
        %v532 = vpop.permute.xlu0 %531
        %535 = vset.pattern.permute.xlu0 0
        %536 = vperm.xlu0 %535, %v483
        %v537 = vpop.permute.xlu0 %536
        %540 = vset.pattern.permute.xlu0 0
        %541 = vperm.xlu0 %540, %v485
        %v542 = vpop.permute.xlu0 %541
        %v544 = vmul.f32 %v271, %v507
        %v545 = vmul.f32 %v276, %v512
        %v546 = vmul.f32 %v281, %v517
        %v547 = vmul.f32 %v286, %v522
        %v548 = vmul.f32 %v291, %v527
        %v549 = vmul.f32 %v296, %v532
        %v550 = vmul.f32 %v301, %v537
        %v551 = vmul.f32 %v306, %v542
        %v552 = vsel %vm317, %v544, 0.0
        %v553 = vsel %vm317, %v546, 0.0
        %v554 = vadd.f32 %v552, %v553
        %v555 = vsel %vm317, %v548, 0.0
        %v556 = vadd.f32 %v554, %v555
        %v557 = vsel %vm317, %v550, 0.0
        %v558 = vadd.f32 %v556, %v557
        %v559 = vsel %vm317, %v545, 0.0
        %v560 = vsel %vm317, %v547, 0.0
        %v561 = vadd.f32 %v559, %v560
        %v562 = vsel %vm317, %v549, 0.0
        %v563 = vadd.f32 %v561, %v562
        %v564 = vsel %vm317, %v551, 0.0
        %v565 = vadd.f32 %v563, %v564
        %567 = vset.pattern.permute.xlu0 0
        %568 = vperm.xlu0 %567, %v501
        %v569 = vpop.permute.xlu0 %568
        %572 = vset.pattern.permute.xlu0 0
        %573 = vperm.xlu0 %572, %v503
        %v574 = vpop.permute.xlu0 %573
        %v576 = vmul.f32 %v558, %v569
        %v577 = vmul.f32 %v565, %v574
        %578 = vst.msk [vmem:[%s163] sm:$0xff] %vm317, %v576
        %579 = vst.msk [vmem:[%s163 + $0x8] sm:$0xff] %vm317, %v577
        %s580 = sand.u32 %s93, 1
        %s581 = scalar_lea.sflag [#allocation3], %s580
        %s582 = sand.u32 %s93, 1
        %s583 = smul.addr %s582, 16
        %s584 = scalar_lea.vmem [#allocation2], %s583
        // Predicated region
        $region33: #{tpu_custom_call.1} parent=31 // pred_check
          %p585 = pneg %p103
        $region34: #{tpu_custom_call.1} parent=31 // pred_check_branch
          %587 = sbr.rel (%p585) target = $region36
        $region35: #{tpu_custom_call.1} parent=31 // pred_region
          %s589 = ssub.s32 256, 256
          %590 = vsyncadd %s581, %s589
          %s591 = smul.addr %s17, 2
          %s592 = smul.addr %s591, 128
          %s593 = scalar_lea.hbm %s3, %s592
          %s594 = sshll.u32 %s584, 4
          %s595 = int_to_ptr.vmem [resolvable:$true] %s594
          %600 = dma.vmem_to_hbm [thread:$0]  %s595, 256, %s593, %s581, 128, 128, 8
        $region36: #{tpu_custom_call.1} parent=31 // pred_fallthru
          _
      $region32: #{tpu_custom_call.1} parent=5 // pred_fallthru
        _
      %p601 = scmp.le.s32.totalorder 2, %s12
      // Predicated region
      $region37: #{tpu_custom_call.1} parent=5 // pred_check
        %p602 = pneg %p601
      $region38: #{tpu_custom_call.1} parent=5 // pred_check_branch
        %604 = sbr.rel (%p602) target = $region40
      $region39: #{tpu_custom_call.1} parent=5 // pred_region
        %s605 = ssub.s32 %s12, 2
        // Predicated region
        $region41: #{tpu_custom_call.1} parent=39 // pred_check
          %p606 = pneg %p109
        $region42: #{tpu_custom_call.1} parent=39 // pred_check_branch
          %608 = sbr.rel (%p606) target = $region44
        $region43: #{tpu_custom_call.1} parent=39 // pred_region
          %s609 = sand.u32 %s94, 1
          %s610 = scalar_lea.sflag [#allocation3], %s609
          %s611 = sand.u32 %s94, 1
          %s612 = smul.addr %s611, 16
          %s613 = scalar_lea.vmem [#allocation2], %s612
          %614 = dma.done %s610, 256
        $region44: #{tpu_custom_call.1} parent=39 // pred_fallthru
          _
      $region40: #{tpu_custom_call.1} parent=5 // pred_fallthru
        _
    $region6: #{tpu_custom_call.1} parent=1 // loop_footer
      %s16 = sadd.s32 1, %s12
    $region7: #{tpu_custom_call.1} parent=1 // loop_footer_branch
      %11 = sbr.rel target = $region3
    $region8: #{tpu_custom_call.1} parent=1 // loop_exit
      _
    %615 = vsyncpa [#allocation3], 1
    %s616 = scalar_lea.sflag [#allocation3], 1
    %617 = vsyncpa %s616, 1

</llo_original>
